<compile_context>
chip_gen: v6e
topology: v6e:2x2x1
jax: 0.10.0
libtpu: 0.0.40
codegen_flags: <defaults>
</compile_context>

<pallas_src>
import math
import numpy as np
import jax
import jax.numpy as jnp
from jax import lax
from jax.experimental import pallas as pl
from jax.experimental.pallas import tpu as pltpu

LANE = 128        # TPU lane width  (last dim)
SUBLANE = 8       # TPU sublane width (second-to-last dim)
TWO_PI = 2.0 * math.pi          # plain Python floats only — never jnp constants
INV_TWO_PI = 1.0 / TWO_PI


def _round_up(n, m):
    return ((n + m - 1) // m) * m


def _pick_tn(rp):
    # Largest column tile in {512, 256, 128} that divides the padded size.
    for tn in (512, 256, 128):
        if rp % tn == 0:
            return tn
    return 128


# ----------------------------------------------------------------------------
# Fused forward kernel (all SCM layers + final linear in one pallas_call)
# ----------------------------------------------------------------------------
def _make_fused_kernel(r_reals, r_pads, tns, b_real, b_pad):
    n_layers = len(r_reals)

    # Static DMA schedule: one (layer, column-tile) job per reservoir tile.
    jobs = []
    for li in range(n_layers):
        for t in range(r_pads[li] // tns[li]):
            jobs.append((li, t))
    n_jobs = len(jobs)

    def _masked_minmax(x, rows_valid, cols_valid):
        # Global min/max over the REAL (rows_valid, cols_valid) region only,
        # so zero-padding never perturbs the normalisation.
        bp, rp = x.shape
        if bp == rows_valid and rp == cols_valid:
            xmax = x
            xmin = x
        else:
            row = lax.broadcasted_iota(jnp.int32, (bp, rp), 0)
            col = lax.broadcasted_iota(jnp.int32, (bp, rp), 1)
            valid = jnp.logical_and(row < rows_valid, col < cols_valid)
            xmax = jnp.where(valid, x, -np.inf)
            xmin = jnp.where(valid, x, np.inf)
        dmax = jnp.max(jnp.max(xmax, axis=1, keepdims=True), axis=0, keepdims=True)
        dmin = jnp.min(jnp.min(xmin, axis=1, keepdims=True), axis=0, keepdims=True)
        return dmin, dmax

    def kernel(*args):
        # args layout:
        #   x, driver, vecs[0..L-1] (VMEM), reservoir[0..L-1] (HBM/ANY),
        #   linear_w_t, linear_b, out_ref,
        #   scratch: res_buf, act_a, act_b, sem
        x_ref = args[0]
        drv_ref = args[1]
        vec_refs = args[2:2 + n_layers]
        res_refs = args[2 + n_layers:2 + 2 * n_layers]
        w_ref = args[2 + 2 * n_layers]
        bias_ref = args[3 + 2 * n_layers]
        out_ref = args[4 + 2 * n_layers]
        res_buf, act_a, act_b, sem = args[5 + 2 * n_layers:]

        acts = (act_a, act_b)

        # One DMA descriptor per job (same object used for start and wait).
        descs = []
        for q, (li, t) in enumerate(jobs):
            rp, tn = r_pads[li], tns[li]
            slot = q % 2
            descs.append(pltpu.make_async_copy(
                res_refs[li].at[:, t * tn:(t + 1) * tn],
                res_buf.at[slot, :rp, :tn],
                sem.at[slot]))

        # Prime the pipeline: the first reservoir tile streams in while the
        # layer-0 input projection and min-max normalisation run.
        descs[0].start()

        q = 0
        act_prev = None
        for li in range(n_layers):
            r, rp, tn = r_reals[li], r_pads[li], tns[li]
            n_tiles = rp // tn
            act_cur = acts[li % 2]

            state = vec_refs[li][0:1, :]
            alphas = vec_refs[li][1:2, :]
            ks = vec_refs[li][2:3, :]        # pre-scaled by 1/(2*pi)
            omegas = vec_refs[li][3:4, :]

            if li == 0:
                # Small zero-padded K: a single MXU pass.
                driven = state + jnp.dot(x_ref[...], drv_ref[...],
                                         preferred_element_type=jnp.float32)
            else:
                # transition == torch.ones(prev, r): x @ ones == row-sum of x
                # broadcast across the reservoir -> no matmul, no weight load.
                rp_prev = r_pads[li - 1]
                rowsum = jnp.sum(act_prev[:, :rp_prev], axis=1, keepdims=True)
                driven = state + rowsum

            # Global min-max normalisation (exact divide; like the reference,
            # no epsilon guard when max == min).
            dmin, dmax = _masked_minmax(driven, b_real, r)
            inv = 1.0 / (dmax - dmin)
            driven_n = (driven - dmin) * inv

            for t in range(n_tiles):
                slot = q % 2
                descs[q].wait()
                if q + 1 < n_jobs:
                    descs[q + 1].start()      # overlaps with this tile's compute

                res_tile = res_buf[slot, :rp, :tn].astype(jnp.float32)
                thetas = jnp.dot(driven_n, res_tile,
                                 preferred_element_type=jnp.float32)
                c0, c1 = t * tn, (t + 1) * tn
                # tensor_scm on this column tile; padded cols stay exactly 0.
                act_cur[:, c0:c1] = (alphas[:, c0:c1] * thetas
                                     + omegas[:, c0:c1]
                                     + ks[:, c0:c1] * jnp.sin(TWO_PI * thetas))
                q += 1

            act_prev = act_cur

        # Final linear: lane-dense (B_pad, O_pad) slab -> unmasked stores.
        rp_last = r_pads[-1]
        out_ref[...] = (jnp.dot(act_prev[:, :rp_last], w_ref[...],
                                preferred_element_type=jnp.float32)
                        + bias_ref[...])

    return kernel


# ----------------------------------------------------------------------------
# Forward wrapper (glue only: padding, pallas_call plumbing, output slice)
# ----------------------------------------------------------------------------
def multi_scm_net_forward(params, x):
    cfg = params["config"]
    b = x.shape[0]
    b_pad = _round_up(max(b, 1), SUBLANE)
    n_layers = len(cfg["reservoir_sizes"])
    rp_max = max(cfg["r_pads"])
    tn_max = max(cfg["tns"])
    o_pad = cfg["o_pad"]
    in_pad = cfg["in_pad"]

    x_pad = jnp.zeros((b_pad, in_pad), jnp.float32)
    x_pad = x_pad.at[:b, :cfg["input_size"]].set(x.astype(jnp.float32))

    kernel = _make_fused_kernel(cfg["reservoir_sizes"], cfg["r_pads"],
                                cfg["tns"], b, b_pad)

    inputs = [x_pad, params["driver"]]
    inputs += [layer["vecs"] for layer in params["layers"]]
    inputs += [layer["reservoir"] for layer in params["layers"]]
    inputs += [params["linear_w_t"], params["linear_b"]]

    vmem = pl.BlockSpec(memory_space=pltpu.MemorySpace.VMEM)
    hbm = pl.BlockSpec(memory_space=pl.ANY)
    in_specs = ([vmem, vmem] + [vmem] * n_layers + [hbm] * n_layers
                + [vmem, vmem])

    # Scoped-VMEM budget: resident inputs/outputs + streaming scratch, with
    # headroom, >= 32 MiB and capped at v7x's 64 MiB physical VMEM.
    resident = (
        x_pad.size * 4
        + params["driver"].size * 4
        + sum(l["vecs"].size * 4 for l in params["layers"])
        + params["linear_w_t"].size * 4 + params["linear_b"].size * 4
        + b_pad * o_pad * 4                      # output slab
        + 2 * rp_max * tn_max * 2                # bf16 reservoir double-buffer
        + 2 * b_pad * rp_max * 4)                # activation ping-pong
    vmem_limit = int(min(64 << 20, max(32 << 20, 2 * resident + (4 << 20))))

    out_pad = pl.pallas_call(
        kernel,
        out_shape=jax.ShapeDtypeStruct((b_pad, o_pad), jnp.float32),
        in_specs=in_specs,
        out_specs=vmem,
        scratch_shapes=[
            pltpu.VMEM((2, rp_max, tn_max), jnp.bfloat16),   # streamed weights
            pltpu.VMEM((b_pad, rp_max), jnp.float32),        # activations ping
            pltpu.VMEM((b_pad, rp_max), jnp.float32),        # activations pong
            pltpu.SemaphoreType.DMA((2,)),
        ],
        compiler_params=pltpu.CompilerParams(vmem_limit_bytes=vmem_limit),
    )(*inputs)

    # slice away batch / output-channel padding outside the kernel
    return out_pad[:b, :cfg["output_size"]]


# ----------------------------------------------------------------------------
# Deterministic parameter construction (synthetic stand-in for __init__)
# ----------------------------------------------------------------------------
def _ring_adjacency(n):
    # Deterministic stand-in for networkx watts_strogatz_graph(n, 3, 0.5):
    # symmetric 0/1 ring lattice plus deterministic long-range links.
    a = np.zeros((n, n), dtype=np.float32)
    for i in range(n):
        a[i, (i + 1) % n] = 1.0
        a[(i + 1) % n, i] = 1.0
        j = (i + n // 3 + 1) % n
        if j != i:
            a[i, j] = 1.0
            a[j, i] = 1.0
    np.fill_diagonal(a, 0.0)
    return a


def build_multi_scm_net(key, input_size, output_size, reservoir_sizes,
                        input_spread=1):
    reservoir_sizes = list(reservoir_sizes)
    r_pads = [_round_up(r, LANE) for r in reservoir_sizes]
    o_pad = _round_up(output_size, LANE)
    in_pad = _round_up(input_size, LANE)
    tns = [_pick_tn(rp) for rp in r_pads]

    params = {
        "layers": [],
        "config": {
            "input_size": input_size,
            "in_pad": in_pad,
            "output_size": output_size,
            "reservoir_sizes": tuple(reservoir_sizes),
            "r_pads": tuple(r_pads),
            "tns": tuple(tns),
            "o_pad": o_pad,
        },
    }

    # driver (in_pad, R0_pad): `input_spread` ones per real row at
    # deterministic positions (stand-in for random.sample), zero-padded.
    driver = np.zeros((in_pad, r_pads[0]), dtype=np.float32)
    for i in range(input_size):
        for s in range(input_spread):
            driver[i, (i * 7 + s * 3) % reservoir_sizes[0]] = 1.0
    params["driver"] = jnp.asarray(driver)

    for r, rp in zip(reservoir_sizes, r_pads):
        key, k_a, k_k, k_o, k_s = jax.random.split(key, 5)
        # Stacked per-layer vectors: rows = [state, alphas, ks/(2*pi), omegas]
        vecs = np.zeros((4, rp), dtype=np.float32)
        vecs[0, :r] = np.asarray(jax.random.uniform(k_s, (r,), jnp.float32))
        vecs[1, :r] = np.asarray(jax.random.uniform(k_a, (r,), jnp.float32))
        vecs[2, :r] = np.asarray(jax.random.uniform(k_k, (r,), jnp.float32)) * INV_TWO_PI
        vecs[3, :r] = np.asarray(jax.random.uniform(k_o, (r,), jnp.float32))

        reservoir = np.zeros((rp, rp), dtype=np.float32)
        reservoir[:r, :r] = _ring_adjacency(r)

        params["layers"].append({
            "vecs": jnp.asarray(vecs),
            # 0/1 adjacency -> bf16 is lossless; halves HBM/VMEM weight bytes.
            "reservoir": jnp.asarray(reservoir, dtype=jnp.bfloat16),
        })
        # NOTE: transitions for layers >= 1 are torch.ones in the reference,
        # so they are folded into a row-sum inside the kernel (no tensor).

    r_last, rp_last = reservoir_sizes[-1], r_pads[-1]
    key, kw, kb = jax.random.split(key, 3)
    bound = 1.0 / math.sqrt(r_last)
    w = jax.random.uniform(kw, (output_size, r_last), jnp.float32, -bound, bound)
    b = jax.random.uniform(kb, (output_size,), jnp.float32, -bound, bound)
    # pre-transposed + zero-padded linear weight: (R_pad, O_pad)
    w_t = np.zeros((rp_last, o_pad), dtype=np.float32)
    w_t[:r_last, :output_size] = np.asarray(w).T
    b_row = np.zeros((1, o_pad), dtype=np.float32)
    b_row[0, :output_size] = np.asarray(b)
    params["linear_w_t"] = jnp.asarray(w_t)
    params["linear_b"] = jnp.asarray(b_row)
    return params


# ----------------------------------------------------------------------------
if __name__ == "__main__":
    key = jax.random.PRNGKey(0)

    input_size = 4
    output_size = 3
    reservoir_sizes = [32, 16]
    batch = 2

    key, kp, kx = jax.random.split(key, 3)
    params = build_multi_scm_net(kp, input_size, output_size,
                                 reservoir_sizes, input_spread=2)
    x = jax.random.normal(kx, (batch, input_size), jnp.float32)

    out = multi_scm_net_forward(params, x)
    out = jax.block_until_ready(out)
    assert out.shape == (batch, output_size)
    assert bool(jnp.all(jnp.isfinite(out)))
    print("KERNEL_OK")
</pallas_src>

<mosaic_0001>
module attributes {stable_mosaic.version = 11 : i64} {
  func.func @kernel(%arg0: memref<8x128xf32, #tpu.memory_space<vmem>>, %arg1: memref<128x128xf32, #tpu.memory_space<vmem>>, %arg2: memref<4x128xf32, #tpu.memory_space<vmem>>, %arg3: memref<4x128xf32, #tpu.memory_space<vmem>>, %arg4: memref<128x128xbf16, #tpu.memory_space<any>>, %arg5: memref<128x128xbf16, #tpu.memory_space<any>>, %arg6: memref<128x128xf32, #tpu.memory_space<vmem>>, %arg7: memref<1x128xf32, #tpu.memory_space<vmem>>, %arg8: memref<8x128xf32, #tpu.memory_space<vmem>>, %arg9: memref<2x128x128xbf16, #tpu.memory_space<vmem>>, %arg10: memref<8x128xf32, #tpu.memory_space<vmem>>, %arg11: memref<8x128xf32, #tpu.memory_space<vmem>>, %arg12: memref<2x!tpu.dma_semaphore, #tpu.memory_space<semaphore_mem>>) attributes {dimension_semantics = [], scalar_prefetch = 0 : i64, scratch_operands = 4 : i64, tpu.core_type = #tpu.core_type<tc>} {
    %c0_i32 = arith.constant 0 : i32
    %c0_i32_0 = arith.constant 0 : i32
    %c0_i32_1 = arith.constant 0 : i32
    %c0_i32_2 = arith.constant 0 : i32
    %0 = tpu.memref_slice %arg4[%c0_i32_1, %c0_i32_2] : memref<128x128xbf16, #tpu.memory_space<any>> -> memref<128x128xbf16, #tpu.memory_space<any>>
    %c0_i32_3 = arith.constant 0 : i32
    %c0_i32_4 = arith.constant 0 : i32
    %1 = tpu.memref_slice %arg9[%c0_i32, %c0_i32_3, %c0_i32_4] : memref<2x128x128xbf16, #tpu.memory_space<vmem>> -> memref<1x128x128xbf16, #tpu.memory_space<vmem>>
    %2 = tpu.memref_squeeze %1 : memref<1x128x128xbf16, #tpu.memory_space<vmem>> -> memref<128x128xbf16, #tpu.memory_space<vmem>>
    %3 = tpu.memref_slice %arg12[%c0_i32_0] : memref<2x!tpu.dma_semaphore, #tpu.memory_space<semaphore_mem>> -> memref<1x!tpu.dma_semaphore, #tpu.memory_space<semaphore_mem>>
    %4 = tpu.memref_squeeze %3 : memref<1x!tpu.dma_semaphore, #tpu.memory_space<semaphore_mem>> -> memref<!tpu.dma_semaphore, #tpu.memory_space<semaphore_mem>>
    tpu.enqueue_dma source(%0 : memref<128x128xbf16, #tpu.memory_space<any>>) target(%2 : memref<128x128xbf16, #tpu.memory_space<vmem>>) target_semaphore(%4 : memref<!tpu.dma_semaphore, #tpu.memory_space<semaphore_mem>>)
    %c0 = arith.constant 0 : index
    %c0_5 = arith.constant 0 : index
    %5 = vector.load %arg2[%c0, %c0_5] : memref<4x128xf32, #tpu.memory_space<vmem>>, vector<1x128xf32>
    %c1 = arith.constant 1 : index
    %c0_6 = arith.constant 0 : index
    %6 = vector.load %arg2[%c1, %c0_6] : memref<4x128xf32, #tpu.memory_space<vmem>>, vector<1x128xf32>
    %c2 = arith.constant 2 : index
    %c0_7 = arith.constant 0 : index
    %7 = vector.load %arg2[%c2, %c0_7] : memref<4x128xf32, #tpu.memory_space<vmem>>, vector<1x128xf32>
    %c3 = arith.constant 3 : index
    %c0_8 = arith.constant 0 : index
    %8 = vector.load %arg2[%c3, %c0_8] : memref<4x128xf32, #tpu.memory_space<vmem>>, vector<1x128xf32>
    %c0_9 = arith.constant 0 : index
    %c0_10 = arith.constant 0 : index
    %9 = vector.load %arg0[%c0_9, %c0_10] : memref<8x128xf32, #tpu.memory_space<vmem>>, vector<8x128xf32>
    %c0_11 = arith.constant 0 : index
    %c0_12 = arith.constant 0 : index
    %10 = vector.load %arg1[%c0_11, %c0_12] : memref<128x128xf32, #tpu.memory_space<vmem>>, vector<128x128xf32>
    %cst = arith.constant dense<0.000000e+00> : vector<8x128xf32>
    %11 = tpu.matmul %9, %10, %cst {dimension_numbers = #tpu.dot_dimension_numbers<[1], [0], [0], [1], [0, 0, 1, 1], [], []>} : vector<8x128xf32>, vector<128x128xf32>, vector<8x128xf32> -> vector<8x128xf32>
    %12 = vector.broadcast %5 : vector<1x128xf32> to vector<8x128xf32>
    %13 = arith.addf %12, %11 : vector<8x128xf32>
    %14 = tpu.iota {dimensions = array<i32: 0>} : vector<8x128xi32>
    %15 = tpu.iota {dimensions = array<i32: 1>} : vector<8x128xi32>
    %c2_i32 = arith.constant 2 : i32
    %16 = vector.broadcast %c2_i32 : i32 to vector<8x128xi32>
    %17 = arith.cmpi slt, %14, %16 : vector<8x128xi32>
    %c32_i32 = arith.constant 32 : i32
    %18 = vector.broadcast %c32_i32 : i32 to vector<8x128xi32>
    %19 = arith.cmpi slt, %15, %18 : vector<8x128xi32>
    %20 = arith.andi %17, %19 : vector<8x128xi1>
    %cst_13 = arith.constant 0xFF800000 : f32
    %21 = vector.broadcast %cst_13 : f32 to vector<8x128xf32>
    %22 = arith.select %20, %13, %21 : vector<8x128xi1>, vector<8x128xf32>
    %cst_14 = arith.constant 0x7F800000 : f32
    %23 = vector.broadcast %cst_14 : f32 to vector<8x128xf32>
    %24 = arith.select %20, %13, %23 : vector<8x128xi1>, vector<8x128xf32>
    %cst_15 = arith.constant dense<0xFF800000> : vector<8xf32>
    %25 = vector.multi_reduction <maximumf>, %22, %cst_15 [1] : vector<8x128xf32> to vector<8xf32>
    %26 = vector.shape_cast %25 : vector<8xf32> to vector<8x1xf32>
    %cst_16 = arith.constant dense<0xFF800000> : vector<1xf32>
    %27 = vector.multi_reduction <maximumf>, %26, %cst_16 [0] : vector<8x1xf32> to vector<1xf32>
    %28 = vector.shape_cast %27 : vector<1xf32> to vector<1x1xf32>
    %cst_17 = arith.constant dense<0x7F800000> : vector<8xf32>
    %29 = vector.multi_reduction <minimumf>, %24, %cst_17 [1] : vector<8x128xf32> to vector<8xf32>
    %30 = vector.shape_cast %29 : vector<8xf32> to vector<8x1xf32>
    %cst_18 = arith.constant dense<0x7F800000> : vector<1xf32>
    %31 = vector.multi_reduction <minimumf>, %30, %cst_18 [0] : vector<8x1xf32> to vector<1xf32>
    %32 = vector.shape_cast %31 : vector<1xf32> to vector<1x1xf32>
    %33 = arith.subf %28, %32 : vector<1x1xf32>
    %cst_19 = arith.constant 1.000000e+00 : f32
    %34 = vector.broadcast %cst_19 : f32 to vector<1x1xf32>
    %35 = arith.divf %34, %33 : vector<1x1xf32>
    %36 = vector.broadcast %32 : vector<1x1xf32> to vector<8x128xf32>
    %37 = arith.subf %13, %36 : vector<8x128xf32>
    %38 = vector.broadcast %35 : vector<1x1xf32> to vector<8x128xf32>
    %39 = arith.mulf %37, %38 : vector<8x128xf32>
    %c0_i32_20 = arith.constant 0 : i32
    %c0_i32_21 = arith.constant 0 : i32
    %c0_i32_22 = arith.constant 0 : i32
    %c0_i32_23 = arith.constant 0 : i32
    %40 = tpu.memref_slice %arg4[%c0_i32_22, %c0_i32_23] : memref<128x128xbf16, #tpu.memory_space<any>> -> memref<128x128xbf16, #tpu.memory_space<any>>
    %c0_i32_24 = arith.constant 0 : i32
    %c0_i32_25 = arith.constant 0 : i32
    %41 = tpu.memref_slice %arg9[%c0_i32_20, %c0_i32_24, %c0_i32_25] : memref<2x128x128xbf16, #tpu.memory_space<vmem>> -> memref<1x128x128xbf16, #tpu.memory_space<vmem>>
    %42 = tpu.memref_squeeze %41 : memref<1x128x128xbf16, #tpu.memory_space<vmem>> -> memref<128x128xbf16, #tpu.memory_space<vmem>>
    %43 = tpu.memref_slice %arg12[%c0_i32_21] : memref<2x!tpu.dma_semaphore, #tpu.memory_space<semaphore_mem>> -> memref<1x!tpu.dma_semaphore, #tpu.memory_space<semaphore_mem>>
    %44 = tpu.memref_squeeze %43 : memref<1x!tpu.dma_semaphore, #tpu.memory_space<semaphore_mem>> -> memref<!tpu.dma_semaphore, #tpu.memory_space<semaphore_mem>>
    tpu.wait_dma2 semaphore(%44 : memref<!tpu.dma_semaphore, #tpu.memory_space<semaphore_mem>>) src(%40 : memref<128x128xbf16, #tpu.memory_space<any>>) dst(%42 : memref<128x128xbf16, #tpu.memory_space<vmem>>)
    %c1_i32 = arith.constant 1 : i32
    %c1_i32_26 = arith.constant 1 : i32
    %c0_i32_27 = arith.constant 0 : i32
    %c0_i32_28 = arith.constant 0 : i32
    %45 = tpu.memref_slice %arg5[%c0_i32_27, %c0_i32_28] : memref<128x128xbf16, #tpu.memory_space<any>> -> memref<128x128xbf16, #tpu.memory_space<any>>
    %c0_i32_29 = arith.constant 0 : i32
    %c0_i32_30 = arith.constant 0 : i32
    %46 = tpu.memref_slice %arg9[%c1_i32, %c0_i32_29, %c0_i32_30] : memref<2x128x128xbf16, #tpu.memory_space<vmem>> -> memref<1x128x128xbf16, #tpu.memory_space<vmem>>
    %47 = tpu.memref_squeeze %46 : memref<1x128x128xbf16, #tpu.memory_space<vmem>> -> memref<128x128xbf16, #tpu.memory_space<vmem>>
    %48 = tpu.memref_slice %arg12[%c1_i32_26] : memref<2x!tpu.dma_semaphore, #tpu.memory_space<semaphore_mem>> -> memref<1x!tpu.dma_semaphore, #tpu.memory_space<semaphore_mem>>
    %49 = tpu.memref_squeeze %48 : memref<1x!tpu.dma_semaphore, #tpu.memory_space<semaphore_mem>> -> memref<!tpu.dma_semaphore, #tpu.memory_space<semaphore_mem>>
    tpu.enqueue_dma source(%45 : memref<128x128xbf16, #tpu.memory_space<any>>) target(%47 : memref<128x128xbf16, #tpu.memory_space<vmem>>) target_semaphore(%49 : memref<!tpu.dma_semaphore, #tpu.memory_space<semaphore_mem>>)
    %c0_31 = arith.constant 0 : index
    %c0_32 = arith.constant 0 : index
    %c0_33 = arith.constant 0 : index
    %50 = vector.load %arg9[%c0_31, %c0_32, %c0_33] : memref<2x128x128xbf16, #tpu.memory_space<vmem>>, vector<1x128x128xbf16>
    %51 = vector.shape_cast %50 : vector<1x128x128xbf16> to vector<128x128xbf16>
    %52 = arith.extf %51 : vector<128x128xbf16> to vector<128x128xf32>
    %cst_34 = arith.constant dense<0.000000e+00> : vector<8x128xf32>
    %53 = tpu.matmul %39, %52, %cst_34 {dimension_numbers = #tpu.dot_dimension_numbers<[1], [0], [0], [1], [0, 0, 1, 1], [], []>} : vector<8x128xf32>, vector<128x128xf32>, vector<8x128xf32> -> vector<8x128xf32>
    %54 = vector.broadcast %6 : vector<1x128xf32> to vector<8x128xf32>
    %55 = arith.mulf %54, %53 : vector<8x128xf32>
    %56 = vector.broadcast %8 : vector<1x128xf32> to vector<8x128xf32>
    %57 = arith.addf %55, %56 : vector<8x128xf32>
    %cst_35 = arith.constant 6.28318548 : f32
    %58 = vector.broadcast %cst_35 : f32 to vector<8x128xf32>
    %59 = arith.mulf %58, %53 : vector<8x128xf32>
    %60 = math.sin %59 : vector<8x128xf32>
    %61 = vector.broadcast %7 : vector<1x128xf32> to vector<8x128xf32>
    %62 = arith.mulf %61, %60 : vector<8x128xf32>
    %63 = arith.addf %57, %62 : vector<8x128xf32>
    %c0_36 = arith.constant 0 : index
    %c0_37 = arith.constant 0 : index
    %64 = vector.load %arg10[%c0_36, %c0_37] : memref<8x128xf32, #tpu.memory_space<vmem>>, vector<8x128xf32>
    tpu.vector_store %arg10[%c0_36, %c0_37], %63 {strides = array<i32>} : memref<8x128xf32, #tpu.memory_space<vmem>>, vector<8x128xf32>,
    %c0_38 = arith.constant 0 : index
    %c0_39 = arith.constant 0 : index
    %65 = vector.load %arg3[%c0_38, %c0_39] : memref<4x128xf32, #tpu.memory_space<vmem>>, vector<1x128xf32>
    %c1_40 = arith.constant 1 : index
    %c0_41 = arith.constant 0 : index
    %66 = vector.load %arg3[%c1_40, %c0_41] : memref<4x128xf32, #tpu.memory_space<vmem>>, vector<1x128xf32>
    %c2_42 = arith.constant 2 : index
    %c0_43 = arith.constant 0 : index
    %67 = vector.load %arg3[%c2_42, %c0_43] : memref<4x128xf32, #tpu.memory_space<vmem>>, vector<1x128xf32>
    %c3_44 = arith.constant 3 : index
    %c0_45 = arith.constant 0 : index
    %68 = vector.load %arg3[%c3_44, %c0_45] : memref<4x128xf32, #tpu.memory_space<vmem>>, vector<1x128xf32>
    %c0_46 = arith.constant 0 : index
    %c0_47 = arith.constant 0 : index
    %69 = vector.load %arg10[%c0_46, %c0_47] : memref<8x128xf32, #tpu.memory_space<vmem>>, vector<8x128xf32>
    %cst_48 = arith.constant dense<0.000000e+00> : vector<8xf32>
    %70 = vector.multi_reduction <add>, %69, %cst_48 [1] : vector<8x128xf32> to vector<8xf32>
    %71 = vector.shape_cast %70 : vector<8xf32> to vector<8x1xf32>
    %72 = vector.broadcast %65 : vector<1x128xf32> to vector<8x128xf32>
    %73 = vector.broadcast %71 : vector<8x1xf32> to vector<8x128xf32>
    %74 = arith.addf %72, %73 : vector<8x128xf32>
    %75 = tpu.iota {dimensions = array<i32: 0>} : vector<8x128xi32>
    %76 = tpu.iota {dimensions = array<i32: 1>} : vector<8x128xi32>
    %c2_i32_49 = arith.constant 2 : i32
    %77 = vector.broadcast %c2_i32_49 : i32 to vector<8x128xi32>
    %78 = arith.cmpi slt, %75, %77 : vector<8x128xi32>
    %c16_i32 = arith.constant 16 : i32
    %79 = vector.broadcast %c16_i32 : i32 to vector<8x128xi32>
    %80 = arith.cmpi slt, %76, %79 : vector<8x128xi32>
    %81 = arith.andi %78, %80 : vector<8x128xi1>
    %cst_50 = arith.constant 0xFF800000 : f32
    %82 = vector.broadcast %cst_50 : f32 to vector<8x128xf32>
    %83 = arith.select %81, %74, %82 : vector<8x128xi1>, vector<8x128xf32>
    %cst_51 = arith.constant 0x7F800000 : f32
    %84 = vector.broadcast %cst_51 : f32 to vector<8x128xf32>
    %85 = arith.select %81, %74, %84 : vector<8x128xi1>, vector<8x128xf32>
    %cst_52 = arith.constant dense<0xFF800000> : vector<8xf32>
    %86 = vector.multi_reduction <maximumf>, %83, %cst_52 [1] : vector<8x128xf32> to vector<8xf32>
    %87 = vector.shape_cast %86 : vector<8xf32> to vector<8x1xf32>
    %cst_53 = arith.constant dense<0xFF800000> : vector<1xf32>
    %88 = vector.multi_reduction <maximumf>, %87, %cst_53 [0] : vector<8x1xf32> to vector<1xf32>
    %89 = vector.shape_cast %88 : vector<1xf32> to vector<1x1xf32>
    %cst_54 = arith.constant dense<0x7F800000> : vector<8xf32>
    %90 = vector.multi_reduction <minimumf>, %85, %cst_54 [1] : vector<8x128xf32> to vector<8xf32>
    %91 = vector.shape_cast %90 : vector<8xf32> to vector<8x1xf32>
    %cst_55 = arith.constant dense<0x7F800000> : vector<1xf32>
    %92 = vector.multi_reduction <minimumf>, %91, %cst_55 [0] : vector<8x1xf32> to vector<1xf32>
    %93 = vector.shape_cast %92 : vector<1xf32> to vector<1x1xf32>
    %94 = arith.subf %89, %93 : vector<1x1xf32>
    %cst_56 = arith.constant 1.000000e+00 : f32
    %95 = vector.broadcast %cst_56 : f32 to vector<1x1xf32>
    %96 = arith.divf %95, %94 : vector<1x1xf32>
    %97 = vector.broadcast %93 : vector<1x1xf32> to vector<8x128xf32>
    %98 = arith.subf %74, %97 : vector<8x128xf32>
    %99 = vector.broadcast %96 : vector<1x1xf32> to vector<8x128xf32>
    %100 = arith.mulf %98, %99 : vector<8x128xf32>
    %c1_i32_57 = arith.constant 1 : i32
    %c1_i32_58 = arith.constant 1 : i32
    %c0_i32_59 = arith.constant 0 : i32
    %c0_i32_60 = arith.constant 0 : i32
    %101 = tpu.memref_slice %arg5[%c0_i32_59, %c0_i32_60] : memref<128x128xbf16, #tpu.memory_space<any>> -> memref<128x128xbf16, #tpu.memory_space<any>>
    %c0_i32_61 = arith.constant 0 : i32
    %c0_i32_62 = arith.constant 0 : i32
    %102 = tpu.memref_slice %arg9[%c1_i32_57, %c0_i32_61, %c0_i32_62] : memref<2x128x128xbf16, #tpu.memory_space<vmem>> -> memref<1x128x128xbf16, #tpu.memory_space<vmem>>
    %103 = tpu.memref_squeeze %102 : memref<1x128x128xbf16, #tpu.memory_space<vmem>> -> memref<128x128xbf16, #tpu.memory_space<vmem>>
    %104 = tpu.memref_slice %arg12[%c1_i32_58] : memref<2x!tpu.dma_semaphore, #tpu.memory_space<semaphore_mem>> -> memref<1x!tpu.dma_semaphore, #tpu.memory_space<semaphore_mem>>
    %105 = tpu.memref_squeeze %104 : memref<1x!tpu.dma_semaphore, #tpu.memory_space<semaphore_mem>> -> memref<!tpu.dma_semaphore, #tpu.memory_space<semaphore_mem>>
    tpu.wait_dma2 semaphore(%105 : memref<!tpu.dma_semaphore, #tpu.memory_space<semaphore_mem>>) src(%101 : memref<128x128xbf16, #tpu.memory_space<any>>) dst(%103 : memref<128x128xbf16, #tpu.memory_space<vmem>>)
    %c1_63 = arith.constant 1 : index
    %c0_64 = arith.constant 0 : index
    %c0_65 = arith.constant 0 : index
    %106 = vector.load %arg9[%c1_63, %c0_64, %c0_65] : memref<2x128x128xbf16, #tpu.memory_space<vmem>>, vector<1x128x128xbf16>
    %107 = vector.shape_cast %106 : vector<1x128x128xbf16> to vector<128x128xbf16>
    %108 = arith.extf %107 : vector<128x128xbf16> to vector<128x128xf32>
    %cst_66 = arith.constant dense<0.000000e+00> : vector<8x128xf32>
    %109 = tpu.matmul %100, %108, %cst_66 {dimension_numbers = #tpu.dot_dimension_numbers<[1], [0], [0], [1], [0, 0, 1, 1], [], []>} : vector<8x128xf32>, vector<128x128xf32>, vector<8x128xf32> -> vector<8x128xf32>
    %110 = vector.broadcast %66 : vector<1x128xf32> to vector<8x128xf32>
    %111 = arith.mulf %110, %109 : vector<8x128xf32>
    %112 = vector.broadcast %68 : vector<1x128xf32> to vector<8x128xf32>
    %113 = arith.addf %111, %112 : vector<8x128xf32>
    %cst_67 = arith.constant 6.28318548 : f32
    %114 = vector.broadcast %cst_67 : f32 to vector<8x128xf32>
    %115 = arith.mulf %114, %109 : vector<8x128xf32>
    %116 = math.sin %115 : vector<8x128xf32>
    %117 = vector.broadcast %67 : vector<1x128xf32> to vector<8x128xf32>
    %118 = arith.mulf %117, %116 : vector<8x128xf32>
    %119 = arith.addf %113, %118 : vector<8x128xf32>
    %c0_68 = arith.constant 0 : index
    %c0_69 = arith.constant 0 : index
    %120 = vector.load %arg11[%c0_68, %c0_69] : memref<8x128xf32, #tpu.memory_space<vmem>>, vector<8x128xf32>
    tpu.vector_store %arg11[%c0_68, %c0_69], %119 {strides = array<i32>} : memref<8x128xf32, #tpu.memory_space<vmem>>, vector<8x128xf32>,
    %c0_70 = arith.constant 0 : index
    %c0_71 = arith.constant 0 : index
    %121 = vector.load %arg11[%c0_70, %c0_71] : memref<8x128xf32, #tpu.memory_space<vmem>>, vector<8x128xf32>
    %c0_72 = arith.constant 0 : index
    %c0_73 = arith.constant 0 : index
    %122 = vector.load %arg6[%c0_72, %c0_73] : memref<128x128xf32, #tpu.memory_space<vmem>>, vector<128x128xf32>
    %cst_74 = arith.constant dense<0.000000e+00> : vector<8x128xf32>
    %123 = tpu.matmul %121, %122, %cst_74 {dimension_numbers = #tpu.dot_dimension_numbers<[1], [0], [0], [1], [0, 0, 1, 1], [], []>} : vector<8x128xf32>, vector<128x128xf32>, vector<8x128xf32> -> vector<8x128xf32>
    %c0_75 = arith.constant 0 : index
    %c0_76 = arith.constant 0 : index
    %124 = vector.load %arg7[%c0_75, %c0_76] : memref<1x128xf32, #tpu.memory_space<vmem>>, vector<1x128xf32>
    %125 = vector.broadcast %124 : vector<1x128xf32> to vector<8x128xf32>
    %126 = arith.addf %123, %125 : vector<8x128xf32>
    %c0_77 = arith.constant 0 : index
    %c0_78 = arith.constant 0 : index
    %127 = vector.load %arg8[%c0_77, %c0_78] : memref<8x128xf32, #tpu.memory_space<vmem>>, vector<8x128xf32>
    tpu.vector_store %arg8[%c0_77, %c0_78], %126 {strides = array<i32>} : memref<8x128xf32, #tpu.memory_space<vmem>>, vector<8x128xf32>,
    return
  }
}

</mosaic_0001>

<llo_original>
// kernel: tpu_custom_call.1
$region0: #{tpu_custom_call.1}
  #allocation0 [shape = 'u32[]', space=smem, size = 0x4, offset = 0x4, fixed_abs, tag = 'smem constant byte address 0x4 - core index']
  #allocation1 [shape = 'u32[144,128]{1,0:T(1,128)}', space=vmem, size = 0x12000, scoped, tag = 'internal scratch']
  #allocation2 [shape = 'bf16[2,128,128]{2,1,0:T(8,128)(2,1)}', space=vmem, size = 0x10000, scoped, tag = 'scratch operand']
  #allocation3 [shape = 'f32[8,128]{1,0:T(8,128)}', space=vmem, size = 0x1000, scoped, tag = 'scratch operand']
  #allocation4 [shape = 'f32[8,128]{1,0:T(8,128)}', space=vmem, size = 0x1000, scoped, tag = 'scratch operand']
  #allocation5 [shape = 's32[2]{0}', space=sflag, size = 0x8, scoped, tag = 'scratch operand']
  #allocation15 [shape = 's32[]', space=sflag, size = 0x4, offset = 0, fixed_abs, tag = 'sflag constant byte address 0x0 - dummy sync flag']
  #allocation16 [shape = 's32[]', space=sflag, size = 0x4, offset = 0, fixed_abs, tag = 'sflag constant byte address 0x0 - dummy sync flag']
  #allocation17 [shape = 'u32[]', space=smem, size = 0x4, offset = 0x44, fixed_abs, tag = 'smem constant byte address 0x44 - assertion arg 0']
  #allocation18 [shape = 'u32[]', space=smem, size = 0x4, offset = 0x48, fixed_abs, tag = 'smem constant byte address 0x48 - assertion arg 1']
  #allocation19 [shape = 's32[]', space=sflag, size = 0x4, offset = 0, fixed_abs, tag = 'sflag constant byte address 0x0 - dummy sync flag']
  #allocation20 [shape = 's32[]', space=sflag, size = 0x4, offset = 0, fixed_abs, tag = 'sflag constant byte address 0x0 - dummy sync flag']
  %s0 = inlined_call_operand.hbm [shape: f32[8,128], index: 0, kind: input, shape index: {}]
  %s1 = inlined_call_operand.hbm [shape: f32[128,128], index: 1, kind: input, shape index: {}]
  %s2 = inlined_call_operand.hbm [shape: f32[4,128], index: 2, kind: input, shape index: {}]
  %s3 = inlined_call_operand.vmem [shape: f32[4,128], index: 3, kind: input, shape index: {}]
  %s4 = inlined_call_operand.hbm [shape: bf16[128,128], index: 4, kind: input, shape index: {}]
  %s5 = inlined_call_operand.hbm [shape: bf16[128,128], index: 5, kind: input, shape index: {}]
  %s6 = inlined_call_operand.hbm [shape: f32[128,128], index: 6, kind: input, shape index: {}]
  %s7 = inlined_call_operand.vmem [shape: f32[1,128], index: 7, kind: input, shape index: {}]
  %s8 = inlined_call_operand.hbm [shape: f32[8,128], index: 8, kind: output, shape index: {}]
  %s9 = sld [smem:[#allocation0]]
  $region58: #{tpu_custom_call.1} parent=0
    _
  %s11 = ssub.s32 1, %s9
  %s12 = scalar_select 0, %s11, %s9
  $region1: #{tpu_custom_call.1} parent=0
    #allocation6 [shape = 'u8[4096]{0}', space=vmem, size = 0x1000, scoped, tag = 'input window, operand 0, single buffered']
    #allocation7 [shape = 's32[1]{0}', space=sflag, size = 0x4, scoped, tag = 'scoped memory for tpu_custom_call.1']
    #allocation8 [shape = 's32[1]{0}', space=sflag, size = 0x4, scoped, tag = 'scoped memory for tpu_custom_call.1']
    #allocation9 [shape = 'u8[65536]{0}', space=vmem, size = 0x10000, scoped, tag = 'input window, operand 1, single buffered']
    #allocation10 [shape = 's32[1]{0}', space=sflag, size = 0x4, scoped, tag = 'scoped memory for tpu_custom_call.1']
    #allocation11 [shape = 'u8[2048]{0}', space=vmem, size = 0x800, scoped, tag = 'input window, operand 2, single buffered']
    #allocation12 [shape = 'u8[65536]{0}', space=vmem, size = 0x10000, scoped, tag = 'input window, operand 6, single buffered']
    #allocation13 [shape = 's32[1]{0}', space=sflag, size = 0x4, scoped, tag = 'scoped memory for tpu_custom_call.1']
    #allocation14 [shape = 'u8[4096]{0}', space=vmem, size = 0x1000, scoped, tag = 'output window, operand 0, single buffered']
    %13 = vsyncpa [#allocation7], 0
    %14 = vsyncpa [#allocation10], 0
    %15 = vsyncpa [#allocation13], 0
    %16 = vsyncpa [#allocation8], 0
    // Predicated region
    $region2: #{tpu_custom_call.1} parent=1 // pred_check
      _
    $region3: #{tpu_custom_call.1} parent=1 // pred_check_branch
      %18 = sbr.rel (0) target = $region5
    $region4: #{tpu_custom_call.1} parent=1 // pred_region
      %s20 = ssub.s32 128, 128
      %21 = vsyncadd [#allocation7], %s20
      %s23 = sshll.u32 [#allocation6], 4
      %s24 = int_to_ptr.vmem [resolvable:$true] %s23
      %26 = dma.hbm_to_vmem [thread:$0]  %s0, 128, %s24, [#allocation7]
    $region5: #{tpu_custom_call.1} parent=1 // pred_fallthru
      _
    // Predicated region
    $region6: #{tpu_custom_call.1} parent=1 // pred_check
      _
    $region7: #{tpu_custom_call.1} parent=1 // pred_check_branch
      %28 = sbr.rel (0) target = $region9
    $region8: #{tpu_custom_call.1} parent=1 // pred_region
      %s30 = ssub.s32 2048, 2048
      %31 = vsyncadd [#allocation10], %s30
      %s32 = sshll.u32 [#allocation9], 4
      %s33 = int_to_ptr.vmem [resolvable:$true] %s32
      %38 = dma.hbm_to_vmem [thread:$0]  %s1, 2048, %s33, [#allocation10], 128, 128, 8
    $region9: #{tpu_custom_call.1} parent=1 // pred_fallthru
      _
    // Predicated region
    $region10: #{tpu_custom_call.1} parent=1 // pred_check
      _
    $region11: #{tpu_custom_call.1} parent=1 // pred_check_branch
      %40 = sbr.rel (0) target = $region13
    $region12: #{tpu_custom_call.1} parent=1 // pred_region
      %s42 = ssub.s32 64, 64
      %43 = vsyncadd [#allocation10], %s42
      %s45 = sshll.u32 [#allocation11], 4
      %s46 = int_to_ptr.vmem [resolvable:$true] %s45
      %48 = dma.hbm_to_vmem [thread:$0]  %s2, 64, %s46, [#allocation10]
    $region13: #{tpu_custom_call.1} parent=1 // pred_fallthru
      _
    // Predicated region
    $region14: #{tpu_custom_call.1} parent=1 // pred_check
      _
    $region15: #{tpu_custom_call.1} parent=1 // pred_check_branch
      %50 = sbr.rel (0) target = $region17
    $region16: #{tpu_custom_call.1} parent=1 // pred_region
      _
    $region17: #{tpu_custom_call.1} parent=1 // pred_fallthru
      _
    // Predicated region
    $region18: #{tpu_custom_call.1} parent=1 // pred_check
      _
    $region19: #{tpu_custom_call.1} parent=1 // pred_check_branch
      %52 = sbr.rel (0) target = $region21
    $region20: #{tpu_custom_call.1} parent=1 // pred_region
      %s54 = ssub.s32 2048, 2048
      %55 = vsyncadd [#allocation13], %s54
      %s56 = sshll.u32 [#allocation12], 4
      %s57 = int_to_ptr.vmem [resolvable:$true] %s56
      %62 = dma.hbm_to_vmem [thread:$0]  %s6, 2048, %s57, [#allocation13], 128, 128, 8
    $region21: #{tpu_custom_call.1} parent=1 // pred_fallthru
      _
    // Predicated region
    $region22: #{tpu_custom_call.1} parent=1 // pred_check
      _
    $region23: #{tpu_custom_call.1} parent=1 // pred_check_branch
      %64 = sbr.rel (0) target = $region25
    $region24: #{tpu_custom_call.1} parent=1 // pred_region
      _
    $region25: #{tpu_custom_call.1} parent=1 // pred_fallthru
      _
    // Predicated region
    $region26: #{tpu_custom_call.1} parent=1 // pred_check
      _
    $region27: #{tpu_custom_call.1} parent=1 // pred_check_branch
      %66 = sbr.rel (0) target = $region29
    $region28: #{tpu_custom_call.1} parent=1 // pred_region
      %67 = dma.done [#allocation7], 128
    $region29: #{tpu_custom_call.1} parent=1 // pred_fallthru
      _
    // Predicated region
    $region30: #{tpu_custom_call.1} parent=1 // pred_check
      _
    $region31: #{tpu_custom_call.1} parent=1 // pred_check_branch
      %69 = sbr.rel (0) target = $region33
    $region32: #{tpu_custom_call.1} parent=1 // pred_region
      %70 = dma.done [#allocation10], 2048
    $region33: #{tpu_custom_call.1} parent=1 // pred_fallthru
      _
    // Predicated region
    $region34: #{tpu_custom_call.1} parent=1 // pred_check
      _
    $region35: #{tpu_custom_call.1} parent=1 // pred_check_branch
      %72 = sbr.rel (0) target = $region37
    $region36: #{tpu_custom_call.1} parent=1 // pred_region
      %73 = dma.done [#allocation10], 64
    $region37: #{tpu_custom_call.1} parent=1 // pred_fallthru
      _
    // Predicated region
    $region38: #{tpu_custom_call.1} parent=1 // pred_check
      _
    $region39: #{tpu_custom_call.1} parent=1 // pred_check_branch
      %75 = sbr.rel (0) target = $region41
    $region40: #{tpu_custom_call.1} parent=1 // pred_region
      %76 = dma.done [#allocation13], 2048
    $region41: #{tpu_custom_call.1} parent=1 // pred_fallthru
      _
    // Predicated region
    $region42: #{tpu_custom_call.1} parent=1 // pred_check
      _
    $region43: #{tpu_custom_call.1} parent=1 // pred_check_branch
      %78 = sbr.rel target = $region45
    $region44: #{tpu_custom_call.1} parent=1 // pred_region
      %79 = sst [smem:[#allocation17]] [#allocation16]
      %80 = sst [smem:[#allocation18]] [#allocation15]
    $region45: #{tpu_custom_call.1} parent=1 // pred_fallthru
      _
    %82 = shalt.err (0)
    %s84 = sshll.u32 [#allocation2], 4
    %s85 = int_to_ptr.vmem [resolvable:$true] %s84
    %87 = dma.hbm_to_vmem [thread:$0]  %s4, 1024, %s85, [#allocation5]
    %v88 = vld [vmem:[#allocation11] sm:$0x1]
    %v89 = vld [vmem:[#allocation11 + $0x1] sm:$0x1]
    %v90 = vld [vmem:[#allocation11 + $0x2] sm:$0x1]
    %v91 = vld [vmem:[#allocation11 + $0x3] sm:$0x1]
    %v92 = vld [vmem:[#allocation6] sm:$0xff]
    %v93 = vld [vmem:[#allocation9] sm:$0xff]
    %v94 = vld [vmem:[#allocation9 + $0x8] sm:$0xff]
    %v95 = vld [vmem:[#allocation9 + $0x10] sm:$0xff]
    %v96 = vld [vmem:[#allocation9 + $0x18] sm:$0xff]
    %v97 = vld [vmem:[#allocation9 + $0x20] sm:$0xff]
    %v98 = vld [vmem:[#allocation9 + $0x28] sm:$0xff]
    %v99 = vld [vmem:[#allocation9 + $0x30] sm:$0xff]
    %v100 = vld [vmem:[#allocation9 + $0x38] sm:$0xff]
    %v101 = vld [vmem:[#allocation9 + $0x40] sm:$0xff]
    %v102 = vld [vmem:[#allocation9 + $0x48] sm:$0xff]
    %v103 = vld [vmem:[#allocation9 + $0x50] sm:$0xff]
    %v104 = vld [vmem:[#allocation9 + $0x58] sm:$0xff]
    %v105 = vld [vmem:[#allocation9 + $0x60] sm:$0xff]
    %v106 = vld [vmem:[#allocation9 + $0x68] sm:$0xff]
    %v107 = vld [vmem:[#allocation9 + $0x70] sm:$0xff]
    %v108 = vld [vmem:[#allocation9 + $0x78] sm:$0xff]
    %109 = vmatprep.subr.mxu0 0.0
    %110 = vmatpush1.msra.mxu0 %v108
    %111 = vmatprep.subr.mxu0 0.0
    %112 = vmatpush1.msra.mxu0 %v107
    %113 = vmatprep.subr.mxu0 0.0
    %114 = vmatpush1.msra.mxu0 %v106
    %115 = vmatprep.subr.mxu0 0.0
    %116 = vmatpush1.msra.mxu0 %v105
    %117 = vmatprep.subr.mxu0 0.0
    %118 = vmatpush1.msra.mxu0 %v104
    %119 = vmatprep.subr.mxu0 0.0
    %120 = vmatpush1.msra.mxu0 %v103
    %121 = vmatprep.subr.mxu0 0.0
    %122 = vmatpush1.msra.mxu0 %v102
    %123 = vmatprep.subr.mxu0 0.0
    %124 = vmatpush1.msra.mxu0 %v101
    %125 = vmatprep.subr.mxu0 0.0
    %126 = vmatpush1.msra.mxu0 %v100
    %127 = vmatprep.subr.mxu0 0.0
    %128 = vmatpush1.msra.mxu0 %v99
    %129 = vmatprep.subr.mxu0 0.0
    %130 = vmatpush1.msra.mxu0 %v98
    %131 = vmatprep.subr.mxu0 0.0
    %132 = vmatpush1.msra.mxu0 %v97
    %133 = vmatprep.subr.mxu0 0.0
    %134 = vmatpush1.msra.mxu0 %v96
    %135 = vmatprep.subr.mxu0 0.0
    %136 = vmatpush1.msra.mxu0 %v95
    %137 = vmatprep.subr.mxu0 0.0
    %138 = vmatpush1.msra.mxu0 %v94
    %139 = vmatprep.subr.mxu0 0.0
    %140 = vmatpush1.msra.mxu0 %v93
    %141 = vmatprep.subr.mxu0 0.0
    %142 = vmatpush2.msra.mxu0 0.0
    %143 = vmatprep.subr.mxu0 0.0
    %144 = vmatpush2.msra.mxu0 0.0
    %145 = vmatprep.subr.mxu0 0.0
    %146 = vmatpush2.msra.mxu0 0.0
    %147 = vmatprep.subr.mxu0 0.0
    %148 = vmatpush2.msra.mxu0 0.0
    %149 = vmatprep.subr.mxu0 0.0
    %150 = vmatpush2.msra.mxu0 0.0
    %151 = vmatprep.subr.mxu0 0.0
    %152 = vmatpush2.msra.mxu0 0.0
    %153 = vmatprep.subr.mxu0 0.0
    %154 = vmatpush2.msra.mxu0 0.0
    %155 = vmatprep.subr.mxu0 0.0
    %156 = vmatpush2.msra.mxu0 0.0
    %157 = vmatprep.subr.mxu0 0.0
    %158 = vmatpush2.msra.mxu0 0.0
    %159 = vmatprep.subr.mxu0 0.0
    %160 = vmatpush2.msra.mxu0 0.0
    %161 = vmatprep.subr.mxu0 0.0
    %162 = vmatpush2.msra.mxu0 0.0
    %163 = vmatprep.subr.mxu0 0.0
    %164 = vmatpush2.msra.mxu0 0.0
    %165 = vmatprep.subr.mxu0 0.0
    %166 = vmatpush2.msra.mxu0 0.0
    %167 = vmatprep.subr.mxu0 0.0
    %168 = vmatpush2.msra.mxu0 0.0
    %169 = vmatprep.subr.mxu0 0.0
    %170 = vmatpush2.msra.mxu0 0.0
    %171 = vmatprep.subr.mxu0 0.0
    %172 = vmatpush2.msra.mxu0 0.0
    %173 = vmatprep.mubr.f32.mxu0 0.0
    %174 = vmatmul.mubr.f32.gmra.mxu0 %v92
    %v175 = vpop.f32.mrf.mxu0
    %v176 = vadd.f32 0.0, %v175
    %v177 = vpop.f32.mrf.mxu0
    %178 = vdwg.mxu0
    %v179 = vlaneseq
    %v180 = vshrl.u32 %v179, 7
    %v181 = vsub.s32 0, %v180
    %v182 = vrot.slane %v88, %v181
    %v183 = vadd.f32 %v182, %v176
    %v184 = vlaneseq
    %v185 = vshrl.u32 %v184, 7
    %v186 = vlaneseq
    %v187 = vand.u32 %v186, 127
    %vm188 = vcmp.lt.s32.totalorder %v185, 2
    %vm189 = vcmp.lt.s32.totalorder %v187, 32
    %vm190 = vmand %vm188, %vm189
    %v191 = vsel %vm190, %v183, -inf
    %v192 = vsel %vm190, %v183, inf
    %193 = vmax.xlane.f32.xlu0 %v191
    %v194 = vpop.xlane.xlu0 %193
    %v195 = vrot.slane %v194, 4
    %v196 = vmax.f32 %v194, %v195
    %v197 = vrot.slane %v196, 2
    %v198 = vmax.f32 %v196, %v197
    %v199 = vrot.slane %v198, 1
    %v200 = vmax.f32 %v198, %v199
    %201 = vmin.xlane.f32.xlu0 %v192
    %v202 = vpop.xlane.xlu0 %201
    %v203 = vrot.slane %v202, 4
    %v204 = vmin.f32 %v202, %v203
    %v205 = vrot.slane %v204, 2
    %v206 = vmin.f32 %v204, %v205
    %v207 = vrot.slane %v206, 1
    %v208 = vmin.f32 %v206, %v207
    %v209 = vsub.f32 %v200, %v208
    %v210 = vrcp.pop %v209
    %v211 = vmul.f32 1.0, %v210
    %v212 = vsub.f32 %v183, %v208
    %v213 = vmul.f32 %v212, %v211
    %s214 = smul.u32 4, 16
    %s215 = smul.u32 %s214, 1
    %s216 = sshll.u32 %s215, 4
    %217 = dma.done [#allocation5], %s216
    %s218 = scalar_lea.vmem [#allocation2], 64
    %s219 = scalar_lea.sflag [#allocation5], 1
    // Predicated region
    $region46: #{tpu_custom_call.1} parent=1 // pred_check
      _
    $region47: #{tpu_custom_call.1} parent=1 // pred_check_branch
      %221 = sbr.rel target = $region49
    $region48: #{tpu_custom_call.1} parent=1 // pred_region
      %222 = sst [smem:[#allocation17]] [#allocation20]
      %223 = sst [smem:[#allocation18]] [#allocation19]
    $region49: #{tpu_custom_call.1} parent=1 // pred_fallthru
      _
    %225 = shalt.err (0)
    %s227 = sshll.u32 %s218, 4
    %s228 = int_to_ptr.vmem [resolvable:$true] %s227
    %230 = dma.hbm_to_vmem [thread:$0]  %s5, 1024, %s228, %s219
    %v231 = vld [vmem:[#allocation2] sm:$0xf]
    %v232 = vld [vmem:[#allocation2 + $0x4] sm:$0xf]
    %v233 = vld [vmem:[#allocation2 + $0x8] sm:$0xf]
    %v234 = vld [vmem:[#allocation2 + $0xc] sm:$0xf]
    %v235 = vld [vmem:[#allocation2 + $0x10] sm:$0xf]
    %v236 = vld [vmem:[#allocation2 + $0x14] sm:$0xf]
    %v237 = vld [vmem:[#allocation2 + $0x18] sm:$0xf]
    %v238 = vld [vmem:[#allocation2 + $0x1c] sm:$0xf]
    %v239 = vld [vmem:[#allocation2 + $0x20] sm:$0xf]
    %v240 = vld [vmem:[#allocation2 + $0x24] sm:$0xf]
    %v241 = vld [vmem:[#allocation2 + $0x28] sm:$0xf]
    %v242 = vld [vmem:[#allocation2 + $0x2c] sm:$0xf]
    %v243 = vld [vmem:[#allocation2 + $0x30] sm:$0xf]
    %v244 = vld [vmem:[#allocation2 + $0x34] sm:$0xf]
    %v245 = vld [vmem:[#allocation2 + $0x38] sm:$0xf]
    %v246 = vld [vmem:[#allocation2 + $0x3c] sm:$0xf]
    %v247 = vunpack.c.l.bf16 %v231
    %v248 = vunpack.c.l.bf16 %v232
    %v249 = vunpack.c.l.bf16 %v233
    %v250 = vunpack.c.l.bf16 %v234
    %v251 = vunpack.c.l.bf16 %v235
    %v252 = vunpack.c.l.bf16 %v236
    %v253 = vunpack.c.l.bf16 %v237
    %v254 = vunpack.c.l.bf16 %v238
    %v255 = vunpack.c.l.bf16 %v239
    %v256 = vunpack.c.l.bf16 %v240
    %v257 = vunpack.c.l.bf16 %v241
    %v258 = vunpack.c.l.bf16 %v242
    %v259 = vunpack.c.l.bf16 %v243
    %v260 = vunpack.c.l.bf16 %v244
    %v261 = vunpack.c.l.bf16 %v245
    %v262 = vunpack.c.l.bf16 %v246
    %263 = vmatprep.subr.mxu0 0.0
    %264 = vmatpush1.msra.mxu0 %v262
    %265 = vmatprep.subr.mxu0 0.0
    %266 = vmatpush1.msra.mxu0 %v261
    %267 = vmatprep.subr.mxu0 0.0
    %268 = vmatpush1.msra.mxu0 %v260
    %269 = vmatprep.subr.mxu0 0.0
    %270 = vmatpush1.msra.mxu0 %v259
    %271 = vmatprep.subr.mxu0 0.0
    %272 = vmatpush1.msra.mxu0 %v258
    %273 = vmatprep.subr.mxu0 0.0
    %274 = vmatpush1.msra.mxu0 %v257
    %275 = vmatprep.subr.mxu0 0.0
    %276 = vmatpush1.msra.mxu0 %v256
    %277 = vmatprep.subr.mxu0 0.0
    %278 = vmatpush1.msra.mxu0 %v255
    %279 = vmatprep.subr.mxu0 0.0
    %280 = vmatpush1.msra.mxu0 %v254
    %281 = vmatprep.subr.mxu0 0.0
    %282 = vmatpush1.msra.mxu0 %v253
    %283 = vmatprep.subr.mxu0 0.0
    %284 = vmatpush1.msra.mxu0 %v252
    %285 = vmatprep.subr.mxu0 0.0
    %286 = vmatpush1.msra.mxu0 %v251
    %287 = vmatprep.subr.mxu0 0.0
    %288 = vmatpush1.msra.mxu0 %v250
    %289 = vmatprep.subr.mxu0 0.0
    %290 = vmatpush1.msra.mxu0 %v249
    %291 = vmatprep.subr.mxu0 0.0
    %292 = vmatpush1.msra.mxu0 %v248
    %293 = vmatprep.subr.mxu0 0.0
    %294 = vmatpush1.msra.mxu0 %v247
    %295 = vmatprep.subr.mxu0 0.0
    %296 = vmatpush2.msra.mxu0 0.0
    %297 = vmatprep.subr.mxu0 0.0
    %298 = vmatpush2.msra.mxu0 0.0
    %299 = vmatprep.subr.mxu0 0.0
    %300 = vmatpush2.msra.mxu0 0.0
    %301 = vmatprep.subr.mxu0 0.0
    %302 = vmatpush2.msra.mxu0 0.0
    %303 = vmatprep.subr.mxu0 0.0
    %304 = vmatpush2.msra.mxu0 0.0
    %305 = vmatprep.subr.mxu0 0.0
    %306 = vmatpush2.msra.mxu0 0.0
    %307 = vmatprep.subr.mxu0 0.0
    %308 = vmatpush2.msra.mxu0 0.0
    %309 = vmatprep.subr.mxu0 0.0
    %310 = vmatpush2.msra.mxu0 0.0
    %311 = vmatprep.subr.mxu0 0.0
    %312 = vmatpush2.msra.mxu0 0.0
    %313 = vmatprep.subr.mxu0 0.0
    %314 = vmatpush2.msra.mxu0 0.0
    %315 = vmatprep.subr.mxu0 0.0
    %316 = vmatpush2.msra.mxu0 0.0
    %317 = vmatprep.subr.mxu0 0.0
    %318 = vmatpush2.msra.mxu0 0.0
    %319 = vmatprep.subr.mxu0 0.0
    %320 = vmatpush2.msra.mxu0 0.0
    %321 = vmatprep.subr.mxu0 0.0
    %322 = vmatpush2.msra.mxu0 0.0
    %323 = vmatprep.subr.mxu0 0.0
    %324 = vmatpush2.msra.mxu0 0.0
    %325 = vmatprep.subr.mxu0 0.0
    %326 = vmatpush2.msra.mxu0 0.0
    %327 = vmatprep.mubr.f32.mxu0 0.0
    %328 = vmatmul.mubr.f32.gmra.mxu0 %v213
    %v329 = vpop.f32.mrf.mxu0
    %v330 = vadd.f32 0.0, %v329
    %v331 = vpop.f32.mrf.mxu0
    %332 = vdwg.mxu0
    %v333 = vlaneseq
    %v334 = vshrl.u32 %v333, 7
    %v335 = vsub.s32 0, %v334
    %v336 = vrot.slane %v89, %v335
    %v337 = vmul.f32 %v336, %v330
    %v338 = vlaneseq
    %v339 = vshrl.u32 %v338, 7
    %v340 = vsub.s32 0, %v339
    %v341 = vrot.slane %v91, %v340
    %v342 = vadd.f32 %v337, %v341
    %v343 = vmul.f32 %v330, 6.2831855
    %v344 = vand.u32 2147483647, %v343
    %vm345 = vcmp.le.f32.partialorder %v344, 0.7853982
    %vm346 = vcmp.lt.s32.totalorder %v343, 0
    %v347 = vand.u32 %v343, 2139095040
    %v348 = vshrl.u32 %v347, 23
    %v349 = vsub.s32 %v348, 127
    %v350 = vand.u32 2147483647, %v343
    %v351 = vand.u32 %v350, 8388607
    %v352 = vor.u32 %v351, 8388608
    %v353 = vsub.s32 0, %v352
    %v354 = vadd.s32 %v349, 1
    %vm355 = vcmp.gt.s32.totalorder %v354, 0
    %v356 = vsel %vm355, %v354, 0
    %v357 = vshrl.u32 %v356, 5
    %v358 = vand.u32 %v356, 31
    %v359 = vsub.s32 32, %v358
    %v360 = vshrl.u32 683565275, %v359
    %v361 = vshll.u32 683565275, %v358
    %v362 = vshrl.u32 2475754826, %v359
    %v363 = vor.u32 %v361, %v362
    %v364 = vshll.u32 2475754826, %v358
    %v365 = vshrl.u32 2131351028, %v359
    %v366 = vor.u32 %v364, %v365
    %v367 = vshll.u32 2131351028, %v358
    %v368 = vshrl.u32 2102212464, %v359
    %v369 = vor.u32 %v367, %v368
    %v370 = vshll.u32 2102212464, %v358
    %v371 = vshrl.u32 920167782, %v359
    %v372 = vor.u32 %v370, %v371
    %v373 = vshll.u32 920167782, %v358
    %v374 = vshrl.u32 1326507024, %v359
    %v375 = vor.u32 %v373, %v374
    %vm376 = vcmp.lt.s32.totalorder %v357, 1
    %vm377 = vcmp.lt.s32.totalorder %v357, 2
    %vm378 = vcmp.lt.s32.totalorder %v357, 3
    %vm379 = vcmp.lt.s32.totalorder %v357, 4
    %v380 = vsel %vm376, %v360, %v363
    %v381 = vsel %vm379, %v369, 2102212464
    %v382 = vsel %vm378, %v366, %v381
    %v383 = vsel %vm377, %v380, %v382
    %v384 = vsel %vm376, %v363, %v366
    %v385 = vsel %vm379, %v372, 920167782
    %v386 = vsel %vm378, %v369, %v385
    %v387 = vsel %vm377, %v384, %v386
    %v388 = vsel %vm376, %v366, %v369
    %v389 = vsel %vm379, %v375, 1326507024
    %v390 = vsel %vm378, %v372, %v389
    %v391 = vsel %vm377, %v388, %v390
    %v392 = vshll.u32 %v352, 8
    %v393 = vmul.u32.u64.compose %v392, %v391
    %v394 = vextract.low.u32 %v393
    %v395 = vextract.high.u32 %v393
    %v396 = vmul.u32.u64.compose %v392, %v387
    %v397 = vextract.low.u32 %v396
    %v398 = vextract.high.u32 %v396
    %v399 = vmul.u32 %v392, %v383
    %v400 = vadd.s32 %v395, %v397
    %vm401 = vc.u32 %v395, %v397
    %v402 = vadd.s32 %v398, 1
    %v403 = vsel %vm401, %v402, %v398
    %v404 = vadd.s32 %v399, %v403
    %v405 = vadd.s32 %v404, 536870912
    %v406 = vshrl.u32 %v405, 30
    %v407 = vshll.u32 %v406, 30
    %v408 = vsub.s32 %v404, %v407
    %vm409 = vcmp.lt.s32.totalorder %v408, 0
    %v410 = vsub.s32 0, %v408
    %v411 = vsel %vm409, %v410, %v408
    %v412 = vclz %v411
    %v413 = vsub.s32 %v412, 2
    %vm414 = vcmp.gt.s32.totalorder 0, %v413
    %v415 = vsel %vm414, 0, %v413
    %v416 = vsub.s32 32, %v415
    %v417 = vshll.u32 %v408, %v415
    %v418 = vshrl.u32 %v400, %v416
    %v419 = vor.u32 %v417, %v418
    %v420 = vsub.s32 4294967266, %v415
    %v421 = vadd.s32 %v420, 127
    %v422 = vshll.u32 %v421, 23
    %v423 = vor.u32 4788187, %v422
    %v424 = vand.u32 2147483647, %v423
    %v426 = vcvt.s32.f32 %v419
    %v427 = vmul.f32 %v426, %v424
    %v428 = vxor.u32 %v427, 2147483648
    %v429 = vsel %vm346, %v428, %v427
    %v430 = vsub.s32 4, %v406
    %v431 = vsel %vm346, %v430, %v406
    %v432 = vsel %vm345, %v343, %v429
    %v433 = vsel %vm345, 0, %v431
    %v434 = vcosq.f32.pop %v432
    %v435 = vsinq.f32.pop %v432
    %vm436 = vweird.f32 %v343
    %v437 = vadd.s32 %v433, 3
    %v438 = vand.u32 %v437, 3
    %vm439 = vcmp.lt.s32.totalorder %v438, 2
    %vm440 = vcmp.eq.s32.totalorder %v438, 0
    %v441 = vxor.u32 %v435, 2147483648
    %v442 = vsel %vm440, %v434, %v441
    %vm443 = vcmp.eq.s32.totalorder %v438, 2
    %v444 = vxor.u32 %v434, 2147483648
    %v445 = vsel %vm443, %v444, %v435
    %v446 = vsel %vm439, %v442, %v445
    %v447 = vsel %vm436, nan, %v446
    %v448 = vlaneseq
    %v449 = vshrl.u32 %v448, 7
    %v450 = vsub.s32 0, %v449
    %v451 = vrot.slane %v90, %v450
    %v452 = vmul.f32 %v451, %v447
    %v453 = vadd.f32 %v342, %v452
    %454 = vst [vmem:[#allocation3] sm:$0xff] %v453
    %v455 = vld [vmem:[%s3] sm:$0x1]
    %v456 = vld [vmem:[%s3 + $0x1] sm:$0x1]
    %v457 = vld [vmem:[%s3 + $0x2] sm:$0x1]
    %v458 = vld [vmem:[%s3 + $0x3] sm:$0x1]
    %v459 = vld [vmem:[#allocation3] sm:$0xff]
    %460 = vadd.xlane.f32.xlu0 %v459
    %v461 = vpop.xlane.xlu0 %460
    %v462 = vlaneseq
    %v463 = vshrl.u32 %v462, 7
    %v464 = vsub.s32 0, %v463
    %v465 = vrot.slane %v455, %v464
    %v466 = vadd.f32 %v465, %v461
    %vm467 = vcmp.lt.s32.totalorder %v187, 16
    %vm468 = vmand %vm188, %vm467
    %v469 = vsel %vm468, %v466, -inf
    %v470 = vsel %vm468, %v466, inf
    %471 = vmax.xlane.f32.xlu0 %v469
    %v472 = vpop.xlane.xlu0 %471
    %v473 = vrot.slane %v472, 4
    %v474 = vmax.f32 %v472, %v473
    %v475 = vrot.slane %v474, 2
    %v476 = vmax.f32 %v474, %v475
    %v477 = vrot.slane %v476, 1
    %v478 = vmax.f32 %v476, %v477
    %479 = vmin.xlane.f32.xlu0 %v470
    %v480 = vpop.xlane.xlu0 %479
    %v481 = vrot.slane %v480, 4
    %v482 = vmin.f32 %v480, %v481
    %v483 = vrot.slane %v482, 2
    %v484 = vmin.f32 %v482, %v483
    %v485 = vrot.slane %v484, 1
    %v486 = vmin.f32 %v484, %v485
    %v487 = vsub.f32 %v478, %v486
    %v488 = vrcp.pop %v487
    %v489 = vmul.f32 1.0, %v488
    %v490 = vsub.f32 %v466, %v486
    %v491 = vmul.f32 %v490, %v489
    %s492 = sshll.u32 %s215, 4
    %493 = dma.done %s219, %s492
    %v494 = vld [vmem:[%s218] sm:$0xf]
    %v495 = vld [vmem:[%s218 + $0x4] sm:$0xf]
    %v496 = vld [vmem:[%s218 + $0x8] sm:$0xf]
    %v497 = vld [vmem:[%s218 + $0xc] sm:$0xf]
    %v498 = vld [vmem:[%s218 + $0x10] sm:$0xf]
    %v499 = vld [vmem:[%s218 + $0x14] sm:$0xf]
    %v500 = vld [vmem:[%s218 + $0x18] sm:$0xf]
    %v501 = vld [vmem:[%s218 + $0x1c] sm:$0xf]
    %v502 = vld [vmem:[%s218 + $0x20] sm:$0xf]
    %v503 = vld [vmem:[%s218 + $0x24] sm:$0xf]
    %v504 = vld [vmem:[%s218 + $0x28] sm:$0xf]
    %v505 = vld [vmem:[%s218 + $0x2c] sm:$0xf]
    %v506 = vld [vmem:[%s218 + $0x30] sm:$0xf]
    %v507 = vld [vmem:[%s218 + $0x34] sm:$0xf]
    %v508 = vld [vmem:[%s218 + $0x38] sm:$0xf]
    %v509 = vld [vmem:[%s218 + $0x3c] sm:$0xf]
    %v510 = vunpack.c.l.bf16 %v494
    %v511 = vunpack.c.l.bf16 %v495
    %v512 = vunpack.c.l.bf16 %v496
    %v513 = vunpack.c.l.bf16 %v497
    %v514 = vunpack.c.l.bf16 %v498
    %v515 = vunpack.c.l.bf16 %v499
    %v516 = vunpack.c.l.bf16 %v500
    %v517 = vunpack.c.l.bf16 %v501
    %v518 = vunpack.c.l.bf16 %v502
    %v519 = vunpack.c.l.bf16 %v503
    %v520 = vunpack.c.l.bf16 %v504
    %v521 = vunpack.c.l.bf16 %v505
    %v522 = vunpack.c.l.bf16 %v506
    %v523 = vunpack.c.l.bf16 %v507
    %v524 = vunpack.c.l.bf16 %v508
    %v525 = vunpack.c.l.bf16 %v509
    %526 = vmatprep.subr.mxu0 0.0
    %527 = vmatpush1.msra.mxu0 %v525
    %528 = vmatprep.subr.mxu0 0.0
    %529 = vmatpush1.msra.mxu0 %v524
    %530 = vmatprep.subr.mxu0 0.0
    %531 = vmatpush1.msra.mxu0 %v523
    %532 = vmatprep.subr.mxu0 0.0
    %533 = vmatpush1.msra.mxu0 %v522
    %534 = vmatprep.subr.mxu0 0.0
    %535 = vmatpush1.msra.mxu0 %v521
    %536 = vmatprep.subr.mxu0 0.0
    %537 = vmatpush1.msra.mxu0 %v520
    %538 = vmatprep.subr.mxu0 0.0
    %539 = vmatpush1.msra.mxu0 %v519
    %540 = vmatprep.subr.mxu0 0.0
    %541 = vmatpush1.msra.mxu0 %v518
    %542 = vmatprep.subr.mxu0 0.0
    %543 = vmatpush1.msra.mxu0 %v517
    %544 = vmatprep.subr.mxu0 0.0
    %545 = vmatpush1.msra.mxu0 %v516
    %546 = vmatprep.subr.mxu0 0.0
    %547 = vmatpush1.msra.mxu0 %v515
    %548 = vmatprep.subr.mxu0 0.0
    %549 = vmatpush1.msra.mxu0 %v514
    %550 = vmatprep.subr.mxu0 0.0
    %551 = vmatpush1.msra.mxu0 %v513
    %552 = vmatprep.subr.mxu0 0.0
    %553 = vmatpush1.msra.mxu0 %v512
    %554 = vmatprep.subr.mxu0 0.0
    %555 = vmatpush1.msra.mxu0 %v511
    %556 = vmatprep.subr.mxu0 0.0
    %557 = vmatpush1.msra.mxu0 %v510
    %558 = vmatprep.subr.mxu0 0.0
    %559 = vmatpush2.msra.mxu0 0.0
    %560 = vmatprep.subr.mxu0 0.0
    %561 = vmatpush2.msra.mxu0 0.0
    %562 = vmatprep.subr.mxu0 0.0
    %563 = vmatpush2.msra.mxu0 0.0
    %564 = vmatprep.subr.mxu0 0.0
    %565 = vmatpush2.msra.mxu0 0.0
    %566 = vmatprep.subr.mxu0 0.0
    %567 = vmatpush2.msra.mxu0 0.0
    %568 = vmatprep.subr.mxu0 0.0
    %569 = vmatpush2.msra.mxu0 0.0
    %570 = vmatprep.subr.mxu0 0.0
    %571 = vmatpush2.msra.mxu0 0.0
    %572 = vmatprep.subr.mxu0 0.0
    %573 = vmatpush2.msra.mxu0 0.0
    %574 = vmatprep.subr.mxu0 0.0
    %575 = vmatpush2.msra.mxu0 0.0
    %576 = vmatprep.subr.mxu0 0.0
    %577 = vmatpush2.msra.mxu0 0.0
    %578 = vmatprep.subr.mxu0 0.0
    %579 = vmatpush2.msra.mxu0 0.0
    %580 = vmatprep.subr.mxu0 0.0
    %581 = vmatpush2.msra.mxu0 0.0
    %582 = vmatprep.subr.mxu0 0.0
    %583 = vmatpush2.msra.mxu0 0.0
    %584 = vmatprep.subr.mxu0 0.0
    %585 = vmatpush2.msra.mxu0 0.0
    %586 = vmatprep.subr.mxu0 0.0
    %587 = vmatpush2.msra.mxu0 0.0
    %588 = vmatprep.subr.mxu0 0.0
    %589 = vmatpush2.msra.mxu0 0.0
    %590 = vmatprep.mubr.f32.mxu0 0.0
    %591 = vmatmul.mubr.f32.gmra.mxu0 %v491
    %v592 = vpop.f32.mrf.mxu0
    %v593 = vadd.f32 0.0, %v592
    %v594 = vpop.f32.mrf.mxu0
    %595 = vdwg.mxu0
    %v596 = vlaneseq
    %v597 = vshrl.u32 %v596, 7
    %v598 = vsub.s32 0, %v597
    %v599 = vrot.slane %v456, %v598
    %v600 = vmul.f32 %v599, %v593
    %v601 = vlaneseq
    %v602 = vshrl.u32 %v601, 7
    %v603 = vsub.s32 0, %v602
    %v604 = vrot.slane %v458, %v603
    %v605 = vadd.f32 %v600, %v604
    %v606 = vmul.f32 %v593, 6.2831855
    %v607 = vand.u32 2147483647, %v606
    %vm608 = vcmp.le.f32.partialorder %v607, 0.7853982
    %vm609 = vcmp.lt.s32.totalorder %v606, 0
    %v610 = vand.u32 %v606, 2139095040
    %v611 = vshrl.u32 %v610, 23
    %v612 = vsub.s32 %v611, 127
    %v613 = vand.u32 2147483647, %v606
    %v614 = vand.u32 %v613, 8388607
    %v615 = vor.u32 %v614, 8388608
    %v616 = vsub.s32 0, %v615
    %v617 = vadd.s32 %v612, 1
    %vm618 = vcmp.gt.s32.totalorder %v617, 0
    %v619 = vsel %vm618, %v617, 0
    %v620 = vshrl.u32 %v619, 5
    %v621 = vand.u32 %v619, 31
    %v622 = vsub.s32 32, %v621
    %v623 = vshrl.u32 683565275, %v622
    %v624 = vshll.u32 683565275, %v621
    %v625 = vshrl.u32 2475754826, %v622
    %v626 = vor.u32 %v624, %v625
    %v627 = vshll.u32 2475754826, %v621
    %v628 = vshrl.u32 2131351028, %v622
    %v629 = vor.u32 %v627, %v628
    %v630 = vshll.u32 2131351028, %v621
    %v631 = vshrl.u32 2102212464, %v622
    %v632 = vor.u32 %v630, %v631
    %v633 = vshll.u32 2102212464, %v621
    %v634 = vshrl.u32 920167782, %v622
    %v635 = vor.u32 %v633, %v634
    %v636 = vshll.u32 920167782, %v621
    %v637 = vshrl.u32 1326507024, %v622
    %v638 = vor.u32 %v636, %v637
    %vm639 = vcmp.lt.s32.totalorder %v620, 1
    %vm640 = vcmp.lt.s32.totalorder %v620, 2
    %vm641 = vcmp.lt.s32.totalorder %v620, 3
    %vm642 = vcmp.lt.s32.totalorder %v620, 4
    %v643 = vsel %vm639, %v623, %v626
    %v644 = vsel %vm642, %v632, 2102212464
    %v645 = vsel %vm641, %v629, %v644
    %v646 = vsel %vm640, %v643, %v645
    %v647 = vsel %vm639, %v626, %v629
    %v648 = vsel %vm642, %v635, 920167782
    %v649 = vsel %vm641, %v632, %v648
    %v650 = vsel %vm640, %v647, %v649
    %v651 = vsel %vm639, %v629, %v632
    %v652 = vsel %vm642, %v638, 1326507024
    %v653 = vsel %vm641, %v635, %v652
    %v654 = vsel %vm640, %v651, %v653
    %v655 = vshll.u32 %v615, 8
    %v656 = vmul.u32.u64.compose %v655, %v654
    %v657 = vextract.low.u32 %v656
    %v658 = vextract.high.u32 %v656
    %v659 = vmul.u32.u64.compose %v655, %v650
    %v660 = vextract.low.u32 %v659
    %v661 = vextract.high.u32 %v659
    %v662 = vmul.u32 %v655, %v646
    %v663 = vadd.s32 %v658, %v660
    %vm664 = vc.u32 %v658, %v660
    %v665 = vadd.s32 %v661, 1
    %v666 = vsel %vm664, %v665, %v661
    %v667 = vadd.s32 %v662, %v666
    %v668 = vadd.s32 %v667, 536870912
    %v669 = vshrl.u32 %v668, 30
    %v670 = vshll.u32 %v669, 30
    %v671 = vsub.s32 %v667, %v670
    %vm672 = vcmp.lt.s32.totalorder %v671, 0
    %v673 = vsub.s32 0, %v671
    %v674 = vsel %vm672, %v673, %v671
    %v675 = vclz %v674
    %v676 = vsub.s32 %v675, 2
    %vm677 = vcmp.gt.s32.totalorder 0, %v676
    %v678 = vsel %vm677, 0, %v676
    %v679 = vsub.s32 32, %v678
    %v680 = vshll.u32 %v671, %v678
    %v681 = vshrl.u32 %v663, %v679
    %v682 = vor.u32 %v680, %v681
    %v683 = vsub.s32 4294967266, %v678
    %v684 = vadd.s32 %v683, 127
    %v685 = vshll.u32 %v684, 23
    %v686 = vor.u32 4788187, %v685
    %v687 = vand.u32 2147483647, %v686
    %v689 = vcvt.s32.f32 %v682
    %v690 = vmul.f32 %v689, %v687
    %v691 = vxor.u32 %v690, 2147483648
    %v692 = vsel %vm609, %v691, %v690
    %v693 = vsub.s32 4, %v669
    %v694 = vsel %vm609, %v693, %v669
    %v695 = vsel %vm608, %v606, %v692
    %v696 = vsel %vm608, 0, %v694
    %v697 = vcosq.f32.pop %v695
    %v698 = vsinq.f32.pop %v695
    %vm699 = vweird.f32 %v606
    %v700 = vadd.s32 %v696, 3
    %v701 = vand.u32 %v700, 3
    %vm702 = vcmp.lt.s32.totalorder %v701, 2
    %vm703 = vcmp.eq.s32.totalorder %v701, 0
    %v704 = vxor.u32 %v698, 2147483648
    %v705 = vsel %vm703, %v697, %v704
    %vm706 = vcmp.eq.s32.totalorder %v701, 2
    %v707 = vxor.u32 %v697, 2147483648
    %v708 = vsel %vm706, %v707, %v698
    %v709 = vsel %vm702, %v705, %v708
    %v710 = vsel %vm699, nan, %v709
    %v711 = vlaneseq
    %v712 = vshrl.u32 %v711, 7
    %v713 = vsub.s32 0, %v712
    %v714 = vrot.slane %v457, %v713
    %v715 = vmul.f32 %v714, %v710
    %v716 = vadd.f32 %v605, %v715
    %717 = vst [vmem:[#allocation4] sm:$0xff] %v716
    %v718 = vld [vmem:[#allocation4] sm:$0xff]
    %v719 = vld [vmem:[#allocation12] sm:$0xff]
    %v720 = vld [vmem:[#allocation12 + $0x8] sm:$0xff]
    %v721 = vld [vmem:[#allocation12 + $0x10] sm:$0xff]
    %v722 = vld [vmem:[#allocation12 + $0x18] sm:$0xff]
    %v723 = vld [vmem:[#allocation12 + $0x20] sm:$0xff]
    %v724 = vld [vmem:[#allocation12 + $0x28] sm:$0xff]
    %v725 = vld [vmem:[#allocation12 + $0x30] sm:$0xff]
    %v726 = vld [vmem:[#allocation12 + $0x38] sm:$0xff]
    %v727 = vld [vmem:[#allocation12 + $0x40] sm:$0xff]
    %v728 = vld [vmem:[#allocation12 + $0x48] sm:$0xff]
    %v729 = vld [vmem:[#allocation12 + $0x50] sm:$0xff]
    %v730 = vld [vmem:[#allocation12 + $0x58] sm:$0xff]
    %v731 = vld [vmem:[#allocation12 + $0x60] sm:$0xff]
    %v732 = vld [vmem:[#allocation12 + $0x68] sm:$0xff]
    %v733 = vld [vmem:[#allocation12 + $0x70] sm:$0xff]
    %v734 = vld [vmem:[#allocation12 + $0x78] sm:$0xff]
    %v735 = vld [vmem:[%s7] sm:$0x1]
    %v737 = vlaneseq
    %v738 = vshrl.u32 %v737, 7
    %v739 = vsub.s32 0, %v738
    %v740 = vrot.slane %v735, %v739
    %742 = vmatprep.subr.mxu0 0.0
    %743 = vmatpush1.msra.mxu0 %v734
    %744 = vmatprep.subr.mxu0 0.0
    %745 = vmatpush1.msra.mxu0 %v733
    %746 = vmatprep.subr.mxu0 0.0
    %747 = vmatpush1.msra.mxu0 %v732
    %748 = vmatprep.subr.mxu0 0.0
    %749 = vmatpush1.msra.mxu0 %v731
    %750 = vmatprep.subr.mxu0 0.0
    %751 = vmatpush1.msra.mxu0 %v730
    %752 = vmatprep.subr.mxu0 0.0
    %753 = vmatpush1.msra.mxu0 %v729
    %754 = vmatprep.subr.mxu0 0.0
    %755 = vmatpush1.msra.mxu0 %v728
    %756 = vmatprep.subr.mxu0 0.0
    %757 = vmatpush1.msra.mxu0 %v727
    %758 = vmatprep.subr.mxu0 0.0
    %759 = vmatpush1.msra.mxu0 %v726
    %760 = vmatprep.subr.mxu0 0.0
    %761 = vmatpush1.msra.mxu0 %v725
    %762 = vmatprep.subr.mxu0 0.0
    %763 = vmatpush1.msra.mxu0 %v724
    %764 = vmatprep.subr.mxu0 0.0
    %765 = vmatpush1.msra.mxu0 %v723
    %766 = vmatprep.subr.mxu0 0.0
    %767 = vmatpush1.msra.mxu0 %v722
    %768 = vmatprep.subr.mxu0 0.0
    %769 = vmatpush1.msra.mxu0 %v721
    %770 = vmatprep.subr.mxu0 0.0
    %771 = vmatpush1.msra.mxu0 %v720
    %772 = vmatprep.subr.mxu0 0.0
    %773 = vmatpush1.msra.mxu0 %v719
    %774 = vmatprep.subr.mxu0 0.0
    %775 = vmatpush2.msra.mxu0 0.0
    %776 = vmatprep.subr.mxu0 0.0
    %777 = vmatpush2.msra.mxu0 0.0
    %778 = vmatprep.subr.mxu0 0.0
    %779 = vmatpush2.msra.mxu0 0.0
    %780 = vmatprep.subr.mxu0 0.0
    %781 = vmatpush2.msra.mxu0 0.0
    %782 = vmatprep.subr.mxu0 0.0
    %783 = vmatpush2.msra.mxu0 0.0
    %784 = vmatprep.subr.mxu0 0.0
    %785 = vmatpush2.msra.mxu0 0.0
    %786 = vmatprep.subr.mxu0 0.0
    %787 = vmatpush2.msra.mxu0 0.0
    %788 = vmatprep.subr.mxu0 0.0
    %789 = vmatpush2.msra.mxu0 0.0
    %790 = vmatprep.subr.mxu0 0.0
    %791 = vmatpush2.msra.mxu0 0.0
    %792 = vmatprep.subr.mxu0 0.0
    %793 = vmatpush2.msra.mxu0 0.0
    %794 = vmatprep.subr.mxu0 0.0
    %795 = vmatpush2.msra.mxu0 0.0
    %796 = vmatprep.subr.mxu0 0.0
    %797 = vmatpush2.msra.mxu0 0.0
    %798 = vmatprep.subr.mxu0 0.0
    %799 = vmatpush2.msra.mxu0 0.0
    %800 = vmatprep.subr.mxu0 0.0
    %801 = vmatpush2.msra.mxu0 0.0
    %802 = vmatprep.subr.mxu0 0.0
    %803 = vmatpush2.msra.mxu0 0.0
    %804 = vmatprep.subr.mxu0 0.0
    %805 = vmatpush2.msra.mxu0 0.0
    %806 = vmatprep.mubr.f32.mxu0 0.0
    %807 = vmatmul.mubr.f32.gmra.mxu0 %v718
    %v808 = vpop.f32.mrf.mxu0
    %v809 = vadd.f32 %v740, %v808
    %v810 = vpop.f32.mrf.mxu0
    %811 = vdwg.mxu0
    %812 = vst [vmem:[#allocation14] sm:$0xff] %v809
    // Predicated region
    $region50: #{tpu_custom_call.1} parent=1 // pred_check
      _
    $region51: #{tpu_custom_call.1} parent=1 // pred_check_branch
      %814 = sbr.rel (0) target = $region53
    $region52: #{tpu_custom_call.1} parent=1 // pred_region
      %s816 = ssub.s32 128, 128
      %817 = vsyncadd [#allocation8], %s816
      %s819 = sshll.u32 [#allocation14], 4
      %s820 = int_to_ptr.vmem [resolvable:$true] %s819
      %822 = dma.vmem_to_hbm [thread:$0]  %s820, 128, %s8, [#allocation8]
    $region53: #{tpu_custom_call.1} parent=1 // pred_fallthru
      _
    // Predicated region
    $region54: #{tpu_custom_call.1} parent=1 // pred_check
      _
    $region55: #{tpu_custom_call.1} parent=1 // pred_check_branch
      %824 = sbr.rel (0) target = $region57
    $region56: #{tpu_custom_call.1} parent=1 // pred_region
      %825 = dma.done [#allocation8], 128
    $region57: #{tpu_custom_call.1} parent=1 // pred_fallthru
      _
    %826 = vsyncpa [#allocation7], 1
    %827 = vsyncpa [#allocation10], 1
    %828 = vsyncpa [#allocation13], 1
    %829 = vsyncpa [#allocation8], 1
  %830 = vsyncmov [#allocation5]
  %s831 = vpop.sfrf %830
  %p832 = scmp.eq.s32.totalorder %s831, 0
  %p833 = pneg %p832
  %835 = shalt.err (%p833)
  %s836 = scalar_lea.sflag [#allocation5], 1
  %837 = vsyncmov %s836
  %s838 = vpop.sfrf %837
  %p839 = scmp.eq.s32.totalorder %s838, 0
  %p840 = pneg %p839
  %842 = shalt.err (%p840)

</llo_original>
